<compile_context>
chip_gen: v6e
topology: v6e:2x2x1
jax: 0.10.0
libtpu: 0.0.40
codegen_flags: <defaults>
</compile_context>

<pallas_src>
import jax
import jax.numpy as jnp
from jax.experimental import pallas as pl
from jax.experimental.pallas import tpu as pltpu


def _pos_enc_kernel(w_ref, o_ref):
    # w_ref: (tS, D) rows of the embedding table for this S-tile.
    # o_ref: (tS, N*D) lane-dense output tile; row s is W[s, :] repeated N
    #        times, which is exactly the row-major flattening of (tS, N, D).
    d = w_ref.shape[1]
    n_rep = o_ref.shape[1] // d
    o_ref[...] = jnp.tile(w_ref[...], (1, n_rep)).astype(o_ref.dtype)


def _choose_ts(S, N, D, out_itemsize, in_itemsize, budget_bytes=28 * 1024 * 1024):
    """Largest S-tile that divides S, is sublane-aligned (multiple of 8), and
    keeps the double-buffered input + output tiles under a v7x-safe budget."""
    if S % 8 != 0:
        return S  # single full-extent block (block == full array dims)
    per_row = 2 * (N * D * out_itemsize + D * in_itemsize)  # 2x = double buffer
    cap = max(8, budget_bytes // per_row)
    ts = 8
    for cand in range(8, S + 1, 8):
        if S % cand == 0 and cand <= cap:
            ts = cand
    return ts


def positional_encoding(x, pos_weight, *, ts=None, out_dtype=None):
    """x: (S, N) int token ids (values unused).  pos_weight: (max_len, D).

    Returns (S, N, D) with out[s, n, :] = pos_weight[s, :].
    """
    S, N = x.shape
    max_len, D = pos_weight.shape
    assert S <= max_len, "sequence length exceeds positional table"

    out_dtype = pos_weight.dtype if out_dtype is None else jnp.dtype(out_dtype)
    out_bytes = jnp.dtype(out_dtype).itemsize
    in_bytes = jnp.dtype(pos_weight.dtype).itemsize

    # Cheap XLA slice so every block spec is against exactly S rows.
    w = pos_weight if S == max_len else pos_weight[:S]

    if ts is None:
        ts = _choose_ts(S, N, D, out_bytes, in_bytes)
    assert S % ts == 0, "S-tile must divide S"
    assert ts % 8 == 0 or ts == S, "S-tile must be sublane-aligned or full"

    grid = (S // ts,)

    # Raise the scoped VMEM limit to cover the double-buffered tiles
    # (v6e default is 32 MiB); keep headroom under v7x's 64 MiB physical.
    need = 2 * ts * (N * D * out_bytes + D * in_bytes)
    vmem_limit = int(min(max(need + (4 << 20), 32 << 20), 56 << 20))

    out2d = pl.pallas_call(
        _pos_enc_kernel,
        out_shape=jax.ShapeDtypeStruct((S, N * D), out_dtype),
        grid_spec=pltpu.PrefetchScalarGridSpec(
            num_scalar_prefetch=0,
            grid=grid,
            # "Embedding lookup" of pos = arange(S): table block i -> out tile i.
            in_specs=[pl.BlockSpec((ts, D), lambda i: (i, 0))],
            # Lane-dense output slab: last dim N*D maps onto lanes unmasked.
            out_specs=pl.BlockSpec((ts, N * D), lambda i: (i, 0)),
        ),
        compiler_params=pltpu.CompilerParams(
            dimension_semantics=("parallel",),
            vmem_limit_bytes=vmem_limit),
    )(w)

    # Free row-major reshape back to the module's (S, N, D) layout.
    return out2d.reshape(S, N, D)


if __name__ == "__main__":
    # Small shapes consistent with the module: seq S=8, batch N=2, d_model=32.
    S, N, d_model, max_len = 8, 2, 32, 64

    key = jax.random.PRNGKey(0)
    k_w, k_x = jax.random.split(key)

    # Deterministic init, matching init_weights(): normal(mean=0, std=0.02).
    pos_weight = 0.02 * jax.random.normal(k_w, (max_len, d_model),
                                          dtype=jnp.float32)
    # Token ids (unused by the forward, shape only).
    x = jax.random.randint(k_x, (S, N), 0, 100, dtype=jnp.int32)

    out = positional_encoding(x, pos_weight)
    out = jax.block_until_ready(out)

    # Reference: out[s, n, :] == pos_weight[s, :]
    ref = jnp.broadcast_to(pos_weight[:S, None, :], (S, N, d_model))
    assert out.shape == (S, N, d_model)
    assert jnp.allclose(out, ref), "mismatch vs reference"

    print("KERNEL_OK")
</pallas_src>

<mosaic_0001>
module attributes {stable_mosaic.version = 11 : i64} {
  func.func @_pos_enc_kernel(%arg0: i32, %arg1: memref<8x32xf32, #tpu.memory_space<vmem>>, %arg2: memref<8x64xf32, #tpu.memory_space<vmem>>) attributes {dimension_semantics = [#tpu.dimension_semantics<parallel>], iteration_bounds = array<i64: 1>, scalar_prefetch = 0 : i64, scratch_operands = 0 : i64, tpu.core_type = #tpu.core_type<tc>, window_params = [{transform_indices = @transform_0, window_bounds = array<i64: 8, 32>}, {transform_indices = @transform_1, window_bounds = array<i64: 8, 64>}]} {
    %c0 = arith.constant 0 : index
    %c0_0 = arith.constant 0 : index
    %0 = vector.load %arg1[%c0, %c0_0] : memref<8x32xf32, #tpu.memory_space<vmem>>, vector<8x32xf32>
    %1 = tpu.concatenate %0, %0 in 1 : vector<8x32xf32>, vector<8x32xf32> -> vector<8x64xf32>
    %c0_1 = arith.constant 0 : index
    %c0_2 = arith.constant 0 : index
    %2 = vector.load %arg2[%c0_1, %c0_2] : memref<8x64xf32, #tpu.memory_space<vmem>>, vector<8x64xf32>
    tpu.vector_store %arg2[%c0_1, %c0_2], %1 {strides = array<i32>} : memref<8x64xf32, #tpu.memory_space<vmem>>, vector<8x64xf32>,
    return
  }
  func.func @transform_0(%arg0: i32) -> (i32, i32) {
    %c0_i32 = arith.constant 0 : i32
    %c0_i32_0 = arith.constant 0 : i32
    return %arg0, %c0_i32 : i32, i32
  }
  func.func @transform_1(%arg0: i32) -> (i32, i32) {
    %c0_i32 = arith.constant 0 : i32
    %c0_i32_0 = arith.constant 0 : i32
    return %arg0, %c0_i32 : i32, i32
  }
}

</mosaic_0001>

<llo_original>
// kernel: tpu_custom_call.1
$region0: #{tpu_custom_call.1}
  #allocation0 [shape = 'u32[]', space=smem, size = 0x4, offset = 0x4, fixed_abs, tag = 'smem constant byte address 0x4 - core index']
  #allocation1 [shape = 'u32[144,128]{1,0:T(1,128)}', space=vmem, size = 0x12000, scoped, tag = 'internal scratch']
  %s0 = inlined_call_operand.hbm [shape: f32[8,32], index: 0, kind: input, shape index: {}]
  %s1 = inlined_call_operand.hbm [shape: f32[8,64], index: 1, kind: output, shape index: {}]
  %s2 = sld [smem:[#allocation0]]
  $region18: #{tpu_custom_call.1} parent=0
    _
  %s4 = ssub.s32 1, %s2
  %s5 = scalar_select 0, %s4, %s2
  $region1: #{tpu_custom_call.1} parent=0
    #allocation2 [shape = 'u8[4096]{0}', space=vmem, size = 0x1000, scoped, tag = 'input window, operand 0, single buffered']
    #allocation3 [shape = 's32[1]{0}', space=sflag, size = 0x4, scoped, tag = 'scoped memory for tpu_custom_call.1']
    #allocation4 [shape = 's32[1]{0}', space=sflag, size = 0x4, scoped, tag = 'scoped memory for tpu_custom_call.1']
    #allocation5 [shape = 'u8[4096]{0}', space=vmem, size = 0x1000, scoped, tag = 'output window, operand 0, single buffered']
    %6 = vsyncpa [#allocation3], 0
    %7 = vsyncpa [#allocation4], 0
    // Predicated region
    $region2: #{tpu_custom_call.1} parent=1 // pred_check
      _
    $region3: #{tpu_custom_call.1} parent=1 // pred_check_branch
      %9 = sbr.rel (0) target = $region5
    $region4: #{tpu_custom_call.1} parent=1 // pred_region
      %s11 = ssub.s32 128, 128
      %12 = vsyncadd [#allocation3], %s11
      %s14 = sshll.u32 [#allocation2], 4
      %s15 = int_to_ptr.vmem [resolvable:$true] %s14
      %17 = dma.hbm_to_vmem [thread:$0]  %s0, 128, %s15, [#allocation3]
    $region5: #{tpu_custom_call.1} parent=1 // pred_fallthru
      _
    // Predicated region
    $region6: #{tpu_custom_call.1} parent=1 // pred_check
      _
    $region7: #{tpu_custom_call.1} parent=1 // pred_check_branch
      %19 = sbr.rel (0) target = $region9
    $region8: #{tpu_custom_call.1} parent=1 // pred_region
      %20 = dma.done [#allocation3], 128
    $region9: #{tpu_custom_call.1} parent=1 // pred_fallthru
      _
    %v21 = vld [vmem:[#allocation2] sm:$0xff]
    %23 = vrot.lane.b32.xlu0 %v21, 32
    %v24 = vpop.permute.xlu0 %23
    %vm26 = vcmask 261120
    %v27 = vsel %vm26, %v21, %v24
    %vm28 = vcmask 523264
    %29 = vst.msk [vmem:[#allocation5] sm:$0xff] %vm28, %v27
    // Predicated region
    $region10: #{tpu_custom_call.1} parent=1 // pred_check
      _
    $region11: #{tpu_custom_call.1} parent=1 // pred_check_branch
      %31 = sbr.rel (0) target = $region13
    $region12: #{tpu_custom_call.1} parent=1 // pred_region
      %s33 = ssub.s32 128, 128
      %34 = vsyncadd [#allocation4], %s33
      %s36 = sshll.u32 [#allocation5], 4
      %s37 = int_to_ptr.vmem [resolvable:$true] %s36
      %39 = dma.vmem_to_hbm [thread:$0]  %s37, 128, %s1, [#allocation4]
    $region13: #{tpu_custom_call.1} parent=1 // pred_fallthru
      _
    // Predicated region
    $region14: #{tpu_custom_call.1} parent=1 // pred_check
      _
    $region15: #{tpu_custom_call.1} parent=1 // pred_check_branch
      %41 = sbr.rel (0) target = $region17
    $region16: #{tpu_custom_call.1} parent=1 // pred_region
      %42 = dma.done [#allocation4], 128
    $region17: #{tpu_custom_call.1} parent=1 // pred_fallthru
      _
    %43 = vsyncpa [#allocation3], 1
    %44 = vsyncpa [#allocation4], 1

</llo_original>
